<compile_context>
chip_gen: v7x
topology: tpu7x:2x2x1
jax: 0.10.0
libtpu: 0.0.40
codegen_flags: <defaults>
</compile_context>

<pallas_src>
import jax
import jax.numpy as jnp
from jax.experimental import pallas as pl
from jax.experimental.pallas import tpu as pltpu

EPS = 1e-5            # nn.BatchNorm1d default eps
NEG_INF = -1e9        # same constant PyTorch module uses for masking


# ----------------------------- Pallas kernel ---------------------------------

def dmm_kernel(bio_ref, clin_ref, mask_ref,
               w1b, w1c, b1, w2, b2, w3, b3,
               wa0, ba0, wa1, ba1, sel0,
               fw1, fb1, fw2, fb2,
               out_ref):
    bio = bio_ref[...]                                         # [B, bio_in]
    clin = clin_ref[...]                                       # [B, clin_in]

    # Fused (block-diagonal) bio+clinical encoder, Linear+BN folded.
    # Layer 1 as two half-input dots (block-diag weight -> no input concat).
    h = (jnp.dot(bio, w1b[...], preferred_element_type=jnp.float32)
         + jnp.dot(clin, w1c[...], preferred_element_type=jnp.float32) + b1[...])
    h = jnp.maximum(h, 0.0)
    h = jnp.maximum(jnp.dot(h, w2[...], preferred_element_type=jnp.float32) + b2[...], 0.0)
    enc = jnp.dot(h, w3[...], preferred_element_type=jnp.float32) + b3[...]   # [B, 2F]

    # Attention scores via VPU multiply + lane reduce (no N=1 MXU matmuls).
    m = mask_ref[...]                                          # [B, 2]
    s0 = jnp.sum(enc * wa0[...], axis=-1, keepdims=True) + ba0[...]   # [B, 1]
    s1 = jnp.sum(enc * wa1[...], axis=-1, keepdims=True) + ba1[...]   # [B, 1]
    s0 = jnp.where(m[:, 0:1] < 0.5, NEG_INF, s0)
    s1 = jnp.where(m[:, 1:2] < 0.5, NEG_INF, s1)

    # 2-way masked softmax in closed form (identical semantics, incl. both-masked
    # -> 0.5/0.5 and single-masked -> exact 0/1 via f32 exp saturation).
    attn0 = 1.0 / (1.0 + jnp.exp(s1 - s0))                     # [B, 1]
    attn1 = 1.0 - attn0

    # Weight each lane-half by its modality attention (no lane slicing needed).
    sel = sel0[...]                                            # [1, 2F]: 1s then 0s
    weighted = enc * (attn0 * sel + attn1 * (1.0 - sel))       # [B, 2F]

    # Classifier (fw1 row-duplicated so the lane-concat slab feeds it directly).
    hc = jnp.maximum(jnp.dot(weighted, fw1[...], preferred_element_type=jnp.float32) + fb1[...], 0.0)
    logits = jnp.dot(hc, fw2[...], preferred_element_type=jnp.float32) + fb2[...]   # [B, pad-2F]

    # Single lane-dense output slab: [features (2F) | padded logits].
    out_ref[...] = jnp.concatenate([enc, logits], axis=-1)


# ------------------------------- wrapper --------------------------------------

_PARAM_ORDER = ["w1b", "w1c", "b1", "w2", "b2", "w3", "b3",
                "wa0", "ba0", "wa1", "ba1", "sel0",
                "fw1", "fb1", "fw2", "fb2"]


def dynamic_multimodal_net(bio, clin, mask, kp):
    B = bio.shape[0]
    F = kp["sel0"].shape[1] // 2
    C = kp["num_classes"]
    out_w = 2 * F + kp["fw2"].shape[1]          # full lane-dense slab width (mult of 128)

    # Overhead-bound kernel: use the biggest batch tile that keeps double-buffered
    # activations comfortably inside scoped VMEM; >2048 rows still gives >=2 grid
    # steps so both v7x TensorCores get work via dimension_semantics.
    tile_b = B if B <= 2048 else 2048
    grid = (pl.cdiv(B, tile_b),)

    vmem_full = pl.BlockSpec(memory_space=pltpu.MemorySpace.VMEM)   # resident weights

    def row(d):
        return pl.BlockSpec((tile_b, d), lambda i: (i, 0))

    weight_args = [kp[k] for k in _PARAM_ORDER]
    out = pl.pallas_call(
        dmm_kernel,
        grid=grid,
        out_shape=jax.ShapeDtypeStruct((B, out_w), jnp.float32),
        in_specs=[row(bio.shape[1]), row(clin.shape[1]), row(mask.shape[1])]
                 + [vmem_full] * len(weight_args),
        out_specs=row(out_w),
        compiler_params=pltpu.CompilerParams(dimension_semantics=("parallel",)),
    )(bio, clin, mask, *weight_args)

    logits = out[:, 2 * F:2 * F + C]
    modality_features = out[:, :2 * F].reshape(B, 2, F)   # free row-major reshape
    return logits, modality_features


# ---------------------------- parameter setup ---------------------------------

def _linear_init(key, fan_in, fan_out):
    kw, kb = jax.random.split(key)
    bound = 1.0 / (fan_in ** 0.5)
    w = jax.random.uniform(kw, (fan_in, fan_out), jnp.float32, -bound, bound)
    b = jax.random.uniform(kb, (fan_out,), jnp.float32, -bound, bound)
    return w, b


def _bn_init(dim):
    # gamma, beta, running_mean, running_var (fresh BatchNorm1d)
    return (jnp.ones((dim,), jnp.float32), jnp.zeros((dim,), jnp.float32),
            jnp.zeros((dim,), jnp.float32), jnp.ones((dim,), jnp.float32))


def init_params(key, bio_in, clin_in, hidden_dims, fusion_dim, num_classes):
    h1, h2 = hidden_dims
    keys = jax.random.split(key, 10)
    p = {}
    # bio encoder
    p["bw1"], p["bb1"] = _linear_init(keys[0], bio_in, h1)
    p["bg1"], p["bbe1"], p["bm1"], p["bv1"] = _bn_init(h1)
    p["bw2"], p["bb2"] = _linear_init(keys[1], h1, h2)
    p["bg2"], p["bbe2"], p["bm2"], p["bv2"] = _bn_init(h2)
    p["bw3"], p["bb3"] = _linear_init(keys[2], h2, fusion_dim)
    # clinical encoder
    p["cw1"], p["cb1"] = _linear_init(keys[3], clin_in, h1)
    p["cg1"], p["cbe1"], p["cm1"], p["cv1"] = _bn_init(h1)
    p["cw2"], p["cb2"] = _linear_init(keys[4], h1, h2)
    p["cg2"], p["cbe2"], p["cm2"], p["cv2"] = _bn_init(h2)
    p["cw3"], p["cb3"] = _linear_init(keys[5], h2, fusion_dim)
    # attention fusion: two Linear(fusion_dim, 1)
    p["wa0"], p["ba0"] = _linear_init(keys[6], fusion_dim, 1)
    p["wa1"], p["ba1"] = _linear_init(keys[7], fusion_dim, 1)
    # classifier
    p["fw1"], p["fb1"] = _linear_init(keys[8], fusion_dim, h2)
    p["fg"], p["fbe"], p["fm"], p["fv"] = _bn_init(h2)
    p["fw2"], p["fb2"] = _linear_init(keys[9], h2, num_classes)
    return p


def _fold_bn(w, b, gamma, beta, mean, var):
    """BN(x@w + b) == x@(w*scale) + ((b-mean)*scale + beta)."""
    scale = gamma / jnp.sqrt(var + EPS)
    return w * scale[None, :], ((b - mean) * scale + beta)[None, :]


def _block_diag(a, b):
    ra, ca = a.shape
    rb, cb = b.shape
    top = jnp.concatenate([a, jnp.zeros((ra, cb), jnp.float32)], axis=1)
    bot = jnp.concatenate([jnp.zeros((rb, ca), jnp.float32), b], axis=1)
    return jnp.concatenate([top, bot], axis=0)


def fold_params(p, fusion_dim, num_classes):
    """Host-side folding: BN into weights, block-diagonal encoder fusion, padded outputs."""
    F = fusion_dim
    kp = {}
    # layer 1: fold BN; keep the two halves of the block-diagonal weight separate
    # so the kernel can consume bio/clin inputs without any host-side concat.
    bw1, bb1 = _fold_bn(p["bw1"], p["bb1"], p["bg1"], p["bbe1"], p["bm1"], p["bv1"])
    cw1, cb1 = _fold_bn(p["cw1"], p["cb1"], p["cg1"], p["cbe1"], p["cm1"], p["cv1"])
    kp["w1b"] = jnp.concatenate(
        [bw1, jnp.zeros((bw1.shape[0], cw1.shape[1]), jnp.float32)], axis=1)
    kp["w1c"] = jnp.concatenate(
        [jnp.zeros((cw1.shape[0], bw1.shape[1]), jnp.float32), cw1], axis=1)
    kp["b1"] = jnp.concatenate([bb1, cb1], axis=1)
    # layer 2: fold BN, block-diag pack (bio | clinical)
    bw2, bb2 = _fold_bn(p["bw2"], p["bb2"], p["bg2"], p["bbe2"], p["bm2"], p["bv2"])
    cw2, cb2 = _fold_bn(p["cw2"], p["cb2"], p["cg2"], p["cbe2"], p["cm2"], p["cv2"])
    kp["w2"] = _block_diag(bw2, cw2)
    kp["b2"] = jnp.concatenate([bb2, cb2], axis=1)
    # encoder output layer (no BN)
    kp["w3"] = _block_diag(p["bw3"], p["cw3"])
    kp["b3"] = jnp.concatenate([p["bb3"], p["cb3"]])[None, :]
    # attention weights laid out as [1, 2F] rows (zero-padded on the other half)
    zf = jnp.zeros((F,), jnp.float32)
    kp["wa0"] = jnp.concatenate([p["wa0"][:, 0], zf])[None, :]
    kp["wa1"] = jnp.concatenate([zf, p["wa1"][:, 0]])[None, :]
    kp["ba0"] = p["ba0"].reshape(1, 1)
    kp["ba1"] = p["ba1"].reshape(1, 1)
    kp["sel0"] = jnp.concatenate([jnp.ones((F,), jnp.float32), zf])[None, :]
    # classifier: fold BN; duplicate rows so the lane-concat slab feeds it directly
    fw1, fb1 = _fold_bn(p["fw1"], p["fb1"], p["fg"], p["fbe"], p["fm"], p["fv"])
    kp["fw1"] = jnp.concatenate([fw1, fw1], axis=0)            # [2F, h2]
    kp["fb1"] = fb1
    # final linear padded so [features | logits | pad] is a lane-dense multiple of 128
    h2 = p["fw2"].shape[0]
    slab_w = ((2 * F + num_classes + 127) // 128) * 128
    logit_w = slab_w - 2 * F
    kp["fw2"] = jnp.zeros((h2, logit_w), jnp.float32).at[:, :num_classes].set(p["fw2"])
    kp["fb2"] = jnp.zeros((1, logit_w), jnp.float32).at[:, :num_classes].set(p["fb2"][None, :])
    kp["num_classes"] = num_classes
    return kp


# --------------------------- pure-JAX reference --------------------------------

def reference(bio, clin, mask, p):
    def bn(x, g, be, m, v):
        return (x - m) / jnp.sqrt(v + EPS) * g + be

    def enc(x, pre):
        h = x @ p[pre + "w1"] + p[pre + "b1"]
        h = jnp.maximum(bn(h, p[pre + "g1"], p[pre + "be1"], p[pre + "m1"], p[pre + "v1"]), 0.0)
        h = h @ p[pre + "w2"] + p[pre + "b2"]
        h = jnp.maximum(bn(h, p[pre + "g2"], p[pre + "be2"], p[pre + "m2"], p[pre + "v2"]), 0.0)
        return h @ p[pre + "w3"] + p[pre + "b3"]

    bf, cf = enc(bio, "b"), enc(clin, "c")
    feats = jnp.stack([bf, cf], axis=1)                        # [B, 2, F]
    scores = jnp.concatenate([bf @ p["wa0"] + p["ba0"], cf @ p["wa1"] + p["ba1"]], axis=1)
    masked = jnp.where(mask == 0.0, NEG_INF, scores)
    attn = jax.nn.softmax(masked, axis=1)[:, :, None]
    fused = jnp.sum(feats * attn, axis=1)
    h = jnp.maximum(bn(fused @ p["fw1"] + p["fb1"], p["fg"], p["fbe"], p["fm"], p["fv"]), 0.0)
    return h @ p["fw2"] + p["fb2"], feats


# ---------------------------------- main ---------------------------------------

if __name__ == "__main__":
    B = 8
    BIO_IN, CLIN_IN = 32, 16
    HIDDEN = (32, 32)
    FUSION = 32
    NUM_CLASSES = 4

    key = jax.random.PRNGKey(0)
    k_bio, k_clin, k_mask, k_param = jax.random.split(key, 4)

    bio_data = jax.random.normal(k_bio, (B, BIO_IN), jnp.float32)
    clinical_data = jax.random.normal(k_clin, (B, CLIN_IN), jnp.float32)
    # modality availability mask [B, 2] with at least one modality per row
    mask = (jax.random.uniform(k_mask, (B, 2)) > 0.3).astype(jnp.float32)
    mask = mask.at[:, 0].set(jnp.maximum(mask[:, 0], 1.0 - mask[:, 1]))

    raw_params = init_params(k_param, BIO_IN, CLIN_IN, HIDDEN, FUSION, NUM_CLASSES)
    kernel_params = fold_params(raw_params, FUSION, NUM_CLASSES)

    logits, modality_features = dynamic_multimodal_net(bio_data, clinical_data, mask, kernel_params)
    jax.block_until_ready((logits, modality_features))

    ref_logits, ref_feats = reference(bio_data, clinical_data, mask, raw_params)
    assert logits.shape == (B, NUM_CLASSES)
    assert modality_features.shape == (B, 2, FUSION)
    assert jnp.allclose(logits, ref_logits, rtol=1e-5, atol=1e-5)
    assert jnp.allclose(modality_features, ref_feats, rtol=1e-5, atol=1e-5)

    print("KERNEL_OK")
</pallas_src>

<mosaic_0001>
module attributes {stable_mosaic.version = 11 : i64} {
  func.func @dmm_kernel(%arg0: i32, %arg1: memref<8x32xf32, #tpu.memory_space<vmem>>, %arg2: memref<8x16xf32, #tpu.memory_space<vmem>>, %arg3: memref<8x2xf32, #tpu.memory_space<vmem>>, %arg4: memref<32x64xf32, #tpu.memory_space<vmem>>, %arg5: memref<16x64xf32, #tpu.memory_space<vmem>>, %arg6: memref<1x64xf32, #tpu.memory_space<vmem>>, %arg7: memref<64x64xf32, #tpu.memory_space<vmem>>, %arg8: memref<1x64xf32, #tpu.memory_space<vmem>>, %arg9: memref<64x64xf32, #tpu.memory_space<vmem>>, %arg10: memref<1x64xf32, #tpu.memory_space<vmem>>, %arg11: memref<1x64xf32, #tpu.memory_space<vmem>>, %arg12: memref<1x1xf32, #tpu.memory_space<vmem>>, %arg13: memref<1x64xf32, #tpu.memory_space<vmem>>, %arg14: memref<1x1xf32, #tpu.memory_space<vmem>>, %arg15: memref<1x64xf32, #tpu.memory_space<vmem>>, %arg16: memref<64x32xf32, #tpu.memory_space<vmem>>, %arg17: memref<1x32xf32, #tpu.memory_space<vmem>>, %arg18: memref<32x64xf32, #tpu.memory_space<vmem>>, %arg19: memref<1x64xf32, #tpu.memory_space<vmem>>, %arg20: memref<8x128xf32, #tpu.memory_space<vmem>>) attributes {dimension_semantics = [#tpu.dimension_semantics<parallel>], iteration_bounds = array<i64: 1>, scalar_prefetch = 0 : i64, scratch_operands = 0 : i64, tpu.core_type = #tpu.core_type<tc>, window_params = [{transform_indices = @transform_0, window_bounds = array<i64: 8, 32>}, {transform_indices = @transform_1, window_bounds = array<i64: 8, 16>}, {transform_indices = @transform_2, window_bounds = array<i64: 8, 2>}, {pipeline_mode = #tpu.pipeline_mode<synchronous>, transform_indices = @transform_3, window_bounds = array<i64: 32, 64>}, {pipeline_mode = #tpu.pipeline_mode<synchronous>, transform_indices = @transform_4, window_bounds = array<i64: 16, 64>}, {pipeline_mode = #tpu.pipeline_mode<synchronous>, transform_indices = @transform_5, window_bounds = array<i64: 1, 64>}, {pipeline_mode = #tpu.pipeline_mode<synchronous>, transform_indices = @transform_6, window_bounds = array<i64: 64, 64>}, {pipeline_mode = #tpu.pipeline_mode<synchronous>, transform_indices = @transform_7, window_bounds = array<i64: 1, 64>}, {pipeline_mode = #tpu.pipeline_mode<synchronous>, transform_indices = @transform_8, window_bounds = array<i64: 64, 64>}, {pipeline_mode = #tpu.pipeline_mode<synchronous>, transform_indices = @transform_9, window_bounds = array<i64: 1, 64>}, {pipeline_mode = #tpu.pipeline_mode<synchronous>, transform_indices = @transform_10, window_bounds = array<i64: 1, 64>}, {pipeline_mode = #tpu.pipeline_mode<synchronous>, transform_indices = @transform_11, window_bounds = array<i64: 1, 1>}, {pipeline_mode = #tpu.pipeline_mode<synchronous>, transform_indices = @transform_12, window_bounds = array<i64: 1, 64>}, {pipeline_mode = #tpu.pipeline_mode<synchronous>, transform_indices = @transform_13, window_bounds = array<i64: 1, 1>}, {pipeline_mode = #tpu.pipeline_mode<synchronous>, transform_indices = @transform_14, window_bounds = array<i64: 1, 64>}, {pipeline_mode = #tpu.pipeline_mode<synchronous>, transform_indices = @transform_15, window_bounds = array<i64: 64, 32>}, {pipeline_mode = #tpu.pipeline_mode<synchronous>, transform_indices = @transform_16, window_bounds = array<i64: 1, 32>}, {pipeline_mode = #tpu.pipeline_mode<synchronous>, transform_indices = @transform_17, window_bounds = array<i64: 32, 64>}, {pipeline_mode = #tpu.pipeline_mode<synchronous>, transform_indices = @transform_18, window_bounds = array<i64: 1, 64>}, {transform_indices = @transform_19, window_bounds = array<i64: 8, 128>}]} {
    %c0 = arith.constant 0 : index
    %c0_0 = arith.constant 0 : index
    %0 = vector.load %arg1[%c0, %c0_0] : memref<8x32xf32, #tpu.memory_space<vmem>>, vector<8x32xf32>
    %c0_1 = arith.constant 0 : index
    %c0_2 = arith.constant 0 : index
    %1 = vector.load %arg2[%c0_1, %c0_2] : memref<8x16xf32, #tpu.memory_space<vmem>>, vector<8x16xf32>
    %c0_3 = arith.constant 0 : index
    %c0_4 = arith.constant 0 : index
    %2 = vector.load %arg4[%c0_3, %c0_4] : memref<32x64xf32, #tpu.memory_space<vmem>>, vector<32x64xf32>
    %cst = arith.constant dense<0.000000e+00> : vector<8x64xf32>
    %3 = tpu.matmul %0, %2, %cst {dimension_numbers = #tpu.dot_dimension_numbers<[1], [0], [0], [1], [0, 0, 1, 1], [], []>} : vector<8x32xf32>, vector<32x64xf32>, vector<8x64xf32> -> vector<8x64xf32>
    %c0_5 = arith.constant 0 : index
    %c0_6 = arith.constant 0 : index
    %4 = vector.load %arg5[%c0_5, %c0_6] : memref<16x64xf32, #tpu.memory_space<vmem>>, vector<16x64xf32>
    %cst_7 = arith.constant dense<0.000000e+00> : vector<8x64xf32>
    %5 = tpu.matmul %1, %4, %cst_7 {dimension_numbers = #tpu.dot_dimension_numbers<[1], [0], [0], [1], [0, 0, 1, 1], [], []>} : vector<8x16xf32>, vector<16x64xf32>, vector<8x64xf32> -> vector<8x64xf32>
    %6 = arith.addf %3, %5 : vector<8x64xf32>
    %c0_8 = arith.constant 0 : index
    %c0_9 = arith.constant 0 : index
    %7 = vector.load %arg6[%c0_8, %c0_9] : memref<1x64xf32, #tpu.memory_space<vmem>>, vector<1x64xf32>
    %8 = vector.broadcast %7 : vector<1x64xf32> to vector<8x64xf32>
    %9 = arith.addf %6, %8 : vector<8x64xf32>
    %cst_10 = arith.constant 0.000000e+00 : f32
    %10 = vector.broadcast %cst_10 : f32 to vector<8x64xf32>
    %11 = arith.maximumf %9, %10 : vector<8x64xf32>
    %c0_11 = arith.constant 0 : index
    %c0_12 = arith.constant 0 : index
    %12 = vector.load %arg7[%c0_11, %c0_12] : memref<64x64xf32, #tpu.memory_space<vmem>>, vector<64x64xf32>
    %cst_13 = arith.constant dense<0.000000e+00> : vector<8x64xf32>
    %13 = tpu.matmul %11, %12, %cst_13 {dimension_numbers = #tpu.dot_dimension_numbers<[1], [0], [0], [1], [0, 0, 1, 1], [], []>} : vector<8x64xf32>, vector<64x64xf32>, vector<8x64xf32> -> vector<8x64xf32>
    %c0_14 = arith.constant 0 : index
    %c0_15 = arith.constant 0 : index
    %14 = vector.load %arg8[%c0_14, %c0_15] : memref<1x64xf32, #tpu.memory_space<vmem>>, vector<1x64xf32>
    %15 = vector.broadcast %14 : vector<1x64xf32> to vector<8x64xf32>
    %16 = arith.addf %13, %15 : vector<8x64xf32>
    %cst_16 = arith.constant 0.000000e+00 : f32
    %17 = vector.broadcast %cst_16 : f32 to vector<8x64xf32>
    %18 = arith.maximumf %16, %17 : vector<8x64xf32>
    %c0_17 = arith.constant 0 : index
    %c0_18 = arith.constant 0 : index
    %19 = vector.load %arg9[%c0_17, %c0_18] : memref<64x64xf32, #tpu.memory_space<vmem>>, vector<64x64xf32>
    %cst_19 = arith.constant dense<0.000000e+00> : vector<8x64xf32>
    %20 = tpu.matmul %18, %19, %cst_19 {dimension_numbers = #tpu.dot_dimension_numbers<[1], [0], [0], [1], [0, 0, 1, 1], [], []>} : vector<8x64xf32>, vector<64x64xf32>, vector<8x64xf32> -> vector<8x64xf32>
    %c0_20 = arith.constant 0 : index
    %c0_21 = arith.constant 0 : index
    %21 = vector.load %arg10[%c0_20, %c0_21] : memref<1x64xf32, #tpu.memory_space<vmem>>, vector<1x64xf32>
    %22 = vector.broadcast %21 : vector<1x64xf32> to vector<8x64xf32>
    %23 = arith.addf %20, %22 : vector<8x64xf32>
    %c0_22 = arith.constant 0 : index
    %c0_23 = arith.constant 0 : index
    %24 = vector.load %arg3[%c0_22, %c0_23] : memref<8x2xf32, #tpu.memory_space<vmem>>, vector<8x2xf32>
    %c0_24 = arith.constant 0 : index
    %c0_25 = arith.constant 0 : index
    %25 = vector.load %arg11[%c0_24, %c0_25] : memref<1x64xf32, #tpu.memory_space<vmem>>, vector<1x64xf32>
    %26 = vector.broadcast %25 : vector<1x64xf32> to vector<8x64xf32>
    %27 = arith.mulf %23, %26 : vector<8x64xf32>
    %cst_26 = arith.constant dense<0.000000e+00> : vector<8xf32>
    %28 = vector.multi_reduction <add>, %27, %cst_26 [1] : vector<8x64xf32> to vector<8xf32>
    %29 = vector.shape_cast %28 : vector<8xf32> to vector<8x1xf32>
    %c0_27 = arith.constant 0 : index
    %c0_28 = arith.constant 0 : index
    %30 = vector.load %arg12[%c0_27, %c0_28] : memref<1x1xf32, #tpu.memory_space<vmem>>, vector<1x1xf32>
    %31 = vector.broadcast %30 : vector<1x1xf32> to vector<8x1xf32>
    %32 = arith.addf %29, %31 : vector<8x1xf32>
    %c0_29 = arith.constant 0 : index
    %c0_30 = arith.constant 0 : index
    %33 = vector.load %arg13[%c0_29, %c0_30] : memref<1x64xf32, #tpu.memory_space<vmem>>, vector<1x64xf32>
    %34 = vector.broadcast %33 : vector<1x64xf32> to vector<8x64xf32>
    %35 = arith.mulf %23, %34 : vector<8x64xf32>
    %cst_31 = arith.constant dense<0.000000e+00> : vector<8xf32>
    %36 = vector.multi_reduction <add>, %35, %cst_31 [1] : vector<8x64xf32> to vector<8xf32>
    %37 = vector.shape_cast %36 : vector<8xf32> to vector<8x1xf32>
    %c0_32 = arith.constant 0 : index
    %c0_33 = arith.constant 0 : index
    %38 = vector.load %arg14[%c0_32, %c0_33] : memref<1x1xf32, #tpu.memory_space<vmem>>, vector<1x1xf32>
    %39 = vector.broadcast %38 : vector<1x1xf32> to vector<8x1xf32>
    %40 = arith.addf %37, %39 : vector<8x1xf32>
    %41 = vector.extract_strided_slice %24 {offsets = [0, 0], sizes = [8, 1], strides = [1, 1]} : vector<8x2xf32> to vector<8x1xf32>
    %cst_34 = arith.constant 5.000000e-01 : f32
    %42 = vector.broadcast %cst_34 : f32 to vector<8x1xf32>
    %43 = arith.cmpf olt, %41, %42 : vector<8x1xf32>
    %cst_35 = arith.constant -1.000000e+09 : f32
    %44 = vector.broadcast %cst_35 : f32 to vector<8x1xf32>
    %45 = arith.select %43, %44, %32 : vector<8x1xi1>, vector<8x1xf32>
    %46 = vector.extract_strided_slice %24 {offsets = [0, 1], sizes = [8, 1], strides = [1, 1]} : vector<8x2xf32> to vector<8x1xf32>
    %cst_36 = arith.constant 5.000000e-01 : f32
    %47 = vector.broadcast %cst_36 : f32 to vector<8x1xf32>
    %48 = arith.cmpf olt, %46, %47 : vector<8x1xf32>
    %cst_37 = arith.constant -1.000000e+09 : f32
    %49 = vector.broadcast %cst_37 : f32 to vector<8x1xf32>
    %50 = arith.select %48, %49, %40 : vector<8x1xi1>, vector<8x1xf32>
    %51 = arith.subf %50, %45 : vector<8x1xf32>
    %52 = math.exp %51 : vector<8x1xf32>
    %cst_38 = arith.constant 1.000000e+00 : f32
    %53 = vector.broadcast %cst_38 : f32 to vector<8x1xf32>
    %54 = arith.addf %53, %52 : vector<8x1xf32>
    %cst_39 = arith.constant 1.000000e+00 : f32
    %55 = vector.broadcast %cst_39 : f32 to vector<8x1xf32>
    %56 = arith.divf %55, %54 : vector<8x1xf32>
    %cst_40 = arith.constant 1.000000e+00 : f32
    %57 = vector.broadcast %cst_40 : f32 to vector<8x1xf32>
    %58 = arith.subf %57, %56 : vector<8x1xf32>
    %c0_41 = arith.constant 0 : index
    %c0_42 = arith.constant 0 : index
    %59 = vector.load %arg15[%c0_41, %c0_42] : memref<1x64xf32, #tpu.memory_space<vmem>>, vector<1x64xf32>
    %60 = vector.broadcast %56 : vector<8x1xf32> to vector<8x64xf32>
    %61 = vector.broadcast %59 : vector<1x64xf32> to vector<8x64xf32>
    %62 = arith.mulf %60, %61 : vector<8x64xf32>
    %cst_43 = arith.constant 1.000000e+00 : f32
    %63 = vector.broadcast %cst_43 : f32 to vector<1x64xf32>
    %64 = arith.subf %63, %59 : vector<1x64xf32>
    %65 = vector.broadcast %58 : vector<8x1xf32> to vector<8x64xf32>
    %66 = vector.broadcast %64 : vector<1x64xf32> to vector<8x64xf32>
    %67 = arith.mulf %65, %66 : vector<8x64xf32>
    %68 = arith.addf %62, %67 : vector<8x64xf32>
    %69 = arith.mulf %23, %68 : vector<8x64xf32>
    %c0_44 = arith.constant 0 : index
    %c0_45 = arith.constant 0 : index
    %70 = vector.load %arg16[%c0_44, %c0_45] : memref<64x32xf32, #tpu.memory_space<vmem>>, vector<64x32xf32>
    %cst_46 = arith.constant dense<0.000000e+00> : vector<8x32xf32>
    %71 = tpu.matmul %69, %70, %cst_46 {dimension_numbers = #tpu.dot_dimension_numbers<[1], [0], [0], [1], [0, 0, 1, 1], [], []>} : vector<8x64xf32>, vector<64x32xf32>, vector<8x32xf32> -> vector<8x32xf32>
    %c0_47 = arith.constant 0 : index
    %c0_48 = arith.constant 0 : index
    %72 = vector.load %arg17[%c0_47, %c0_48] : memref<1x32xf32, #tpu.memory_space<vmem>>, vector<1x32xf32>
    %73 = vector.broadcast %72 : vector<1x32xf32> to vector<8x32xf32>
    %74 = arith.addf %71, %73 : vector<8x32xf32>
    %cst_49 = arith.constant 0.000000e+00 : f32
    %75 = vector.broadcast %cst_49 : f32 to vector<8x32xf32>
    %76 = arith.maximumf %74, %75 : vector<8x32xf32>
    %c0_50 = arith.constant 0 : index
    %c0_51 = arith.constant 0 : index
    %77 = vector.load %arg18[%c0_50, %c0_51] : memref<32x64xf32, #tpu.memory_space<vmem>>, vector<32x64xf32>
    %cst_52 = arith.constant dense<0.000000e+00> : vector<8x64xf32>
    %78 = tpu.matmul %76, %77, %cst_52 {dimension_numbers = #tpu.dot_dimension_numbers<[1], [0], [0], [1], [0, 0, 1, 1], [], []>} : vector<8x32xf32>, vector<32x64xf32>, vector<8x64xf32> -> vector<8x64xf32>
    %c0_53 = arith.constant 0 : index
    %c0_54 = arith.constant 0 : index
    %79 = vector.load %arg19[%c0_53, %c0_54] : memref<1x64xf32, #tpu.memory_space<vmem>>, vector<1x64xf32>
    %80 = vector.broadcast %79 : vector<1x64xf32> to vector<8x64xf32>
    %81 = arith.addf %78, %80 : vector<8x64xf32>
    %82 = tpu.concatenate %23, %81 in 1 : vector<8x64xf32>, vector<8x64xf32> -> vector<8x128xf32>
    %c0_55 = arith.constant 0 : index
    %c0_56 = arith.constant 0 : index
    %83 = vector.load %arg20[%c0_55, %c0_56] : memref<8x128xf32, #tpu.memory_space<vmem>>, vector<8x128xf32>
    tpu.vector_store %arg20[%c0_55, %c0_56], %82 {strides = array<i32>} : memref<8x128xf32, #tpu.memory_space<vmem>>, vector<8x128xf32>,
    return
  }
  func.func @transform_0(%arg0: i32) -> (i32, i32) {
    %c0_i32 = arith.constant 0 : i32
    %c0_i32_0 = arith.constant 0 : i32
    return %arg0, %c0_i32 : i32, i32
  }
  func.func @transform_1(%arg0: i32) -> (i32, i32) {
    %c0_i32 = arith.constant 0 : i32
    %c0_i32_0 = arith.constant 0 : i32
    return %arg0, %c0_i32 : i32, i32
  }
  func.func @transform_2(%arg0: i32) -> (i32, i32) {
    %c0_i32 = arith.constant 0 : i32
    %c0_i32_0 = arith.constant 0 : i32
    return %arg0, %c0_i32 : i32, i32
  }
  func.func @transform_3(%arg0: i32) -> (i32, i32) {
    %c0_i32 = arith.constant 0 : i32
    %c0_i32_0 = arith.constant 0 : i32
    %c0_i32_1 = arith.constant 0 : i32
    return %c0_i32, %c0_i32_0 : i32, i32
  }
  func.func @transform_4(%arg0: i32) -> (i32, i32) {
    %c0_i32 = arith.constant 0 : i32
    %c0_i32_0 = arith.constant 0 : i32
    %c0_i32_1 = arith.constant 0 : i32
    return %c0_i32, %c0_i32_0 : i32, i32
  }
  func.func @transform_5(%arg0: i32) -> (i32, i32) {
    %c0_i32 = arith.constant 0 : i32
    %c0_i32_0 = arith.constant 0 : i32
    %c0_i32_1 = arith.constant 0 : i32
    return %c0_i32, %c0_i32_0 : i32, i32
  }
  func.func @transform_6(%arg0: i32) -> (i32, i32) {
    %c0_i32 = arith.constant 0 : i32
    %c0_i32_0 = arith.constant 0 : i32
    %c0_i32_1 = arith.constant 0 : i32
    return %c0_i32, %c0_i32_0 : i32, i32
  }
  func.func @transform_7(%arg0: i32) -> (i32, i32) {
    %c0_i32 = arith.constant 0 : i32
    %c0_i32_0 = arith.constant 0 : i32
    %c0_i32_1 = arith.constant 0 : i32
    return %c0_i32, %c0_i32_0 : i32, i32
  }
  func.func @transform_8(%arg0: i32) -> (i32, i32) {
    %c0_i32 = arith.constant 0 : i32
    %c0_i32_0 = arith.constant 0 : i32
    %c0_i32_1 = arith.constant 0 : i32
    return %c0_i32, %c0_i32_0 : i32, i32
  }
  func.func @transform_9(%arg0: i32) -> (i32, i32) {
    %c0_i32 = arith.constant 0 : i32
    %c0_i32_0 = arith.constant 0 : i32
    %c0_i32_1 = arith.constant 0 : i32
    return %c0_i32, %c0_i32_0 : i32, i32
  }
  func.func @transform_10(%arg0: i32) -> (i32, i32) {
    %c0_i32 = arith.constant 0 : i32
    %c0_i32_0 = arith.constant 0 : i32
    %c0_i32_1 = arith.constant 0 : i32
    return %c0_i32, %c0_i32_0 : i32, i32
  }
  func.func @transform_11(%arg0: i32) -> (i32, i32) {
    %c0_i32 = arith.constant 0 : i32
    %c0_i32_0 = arith.constant 0 : i32
    %c0_i32_1 = arith.constant 0 : i32
    return %c0_i32, %c0_i32_0 : i32, i32
  }
  func.func @transform_12(%arg0: i32) -> (i32, i32) {
    %c0_i32 = arith.constant 0 : i32
    %c0_i32_0 = arith.constant 0 : i32
    %c0_i32_1 = arith.constant 0 : i32
    return %c0_i32, %c0_i32_0 : i32, i32
  }
  func.func @transform_13(%arg0: i32) -> (i32, i32) {
    %c0_i32 = arith.constant 0 : i32
    %c0_i32_0 = arith.constant 0 : i32
    %c0_i32_1 = arith.constant 0 : i32
    return %c0_i32, %c0_i32_0 : i32, i32
  }
  func.func @transform_14(%arg0: i32) -> (i32, i32) {
    %c0_i32 = arith.constant 0 : i32
    %c0_i32_0 = arith.constant 0 : i32
    %c0_i32_1 = arith.constant 0 : i32
    return %c0_i32, %c0_i32_0 : i32, i32
  }
  func.func @transform_15(%arg0: i32) -> (i32, i32) {
    %c0_i32 = arith.constant 0 : i32
    %c0_i32_0 = arith.constant 0 : i32
    %c0_i32_1 = arith.constant 0 : i32
    return %c0_i32, %c0_i32_0 : i32, i32
  }
  func.func @transform_16(%arg0: i32) -> (i32, i32) {
    %c0_i32 = arith.constant 0 : i32
    %c0_i32_0 = arith.constant 0 : i32
    %c0_i32_1 = arith.constant 0 : i32
    return %c0_i32, %c0_i32_0 : i32, i32
  }
  func.func @transform_17(%arg0: i32) -> (i32, i32) {
    %c0_i32 = arith.constant 0 : i32
    %c0_i32_0 = arith.constant 0 : i32
    %c0_i32_1 = arith.constant 0 : i32
    return %c0_i32, %c0_i32_0 : i32, i32
  }
  func.func @transform_18(%arg0: i32) -> (i32, i32) {
    %c0_i32 = arith.constant 0 : i32
    %c0_i32_0 = arith.constant 0 : i32
    %c0_i32_1 = arith.constant 0 : i32
    return %c0_i32, %c0_i32_0 : i32, i32
  }
  func.func @transform_19(%arg0: i32) -> (i32, i32) {
    %c0_i32 = arith.constant 0 : i32
    %c0_i32_0 = arith.constant 0 : i32
    return %arg0, %c0_i32 : i32, i32
  }
}

</mosaic_0001>

<llo_original>
// kernel: tpu_custom_call.1
$region0: #{tpu_custom_call.1}
  #allocation0 [shape = 'u32[]', space=smem, size = 0x4, offset = 0x4, fixed_abs, tag = 'smem constant byte address 0x4 - core index']
  #allocation1 [shape = 'u32[144,128]{1,0:T(1,128)}', space=vmem, size = 0x12000, scoped, tag = 'internal scratch']
  #allocation2 [shape = 'f32[1,1]{1,0:T(1,128)S(1)}', space=vmem, size = 0x200, scoped, tag = 'scoped memory for tpu_custom_call.1']
  #allocation3 [shape = 'f32[1,1]{1,0:T(1,128)S(1)}', space=vmem, size = 0x200, scoped, tag = 'scoped memory for tpu_custom_call.1']
  %s0 = inlined_call_operand.hbm [shape: f32[8,32], index: 0, kind: input, shape index: {}]
  %s1 = inlined_call_operand.hbm [shape: f32[8,16], index: 1, kind: input, shape index: {}]
  %s2 = inlined_call_operand.vmem [shape: f32[8,2], index: 2, kind: input, shape index: {}]
  %s3 = inlined_call_operand.hbm [shape: f32[32,64], index: 3, kind: input, shape index: {}]
  %s4 = inlined_call_operand.hbm [shape: f32[16,64], index: 4, kind: input, shape index: {}]
  %s5 = inlined_call_operand.vmem [shape: f32[1,64], index: 5, kind: input, shape index: {}]
  %s6 = inlined_call_operand.vmem [shape: f32[64,64], index: 6, kind: input, shape index: {}]
  %s7 = inlined_call_operand.vmem [shape: f32[1,64], index: 7, kind: input, shape index: {}]
  %s8 = inlined_call_operand.vmem [shape: f32[64,64], index: 8, kind: input, shape index: {}]
  %s9 = inlined_call_operand.hbm [shape: f32[1,64], index: 9, kind: input, shape index: {}]
  %s10 = inlined_call_operand.hbm [shape: f32[1,64], index: 10, kind: input, shape index: {}]
  %s11 = inlined_call_operand.<no memory space> [shape: f32[1,1], index: 11, kind: input, shape index: {}]
  %s12 = inlined_call_operand.hbm [shape: f32[1,64], index: 12, kind: input, shape index: {}]
  %s13 = inlined_call_operand.<no memory space> [shape: f32[1,1], index: 13, kind: input, shape index: {}]
  %s14 = inlined_call_operand.hbm [shape: f32[1,64], index: 14, kind: input, shape index: {}]
  %s15 = inlined_call_operand.vmem [shape: f32[64,32], index: 15, kind: input, shape index: {}]
  %s16 = inlined_call_operand.vmem [shape: f32[1,32], index: 16, kind: input, shape index: {}]
  %s17 = inlined_call_operand.hbm [shape: f32[32,64], index: 17, kind: input, shape index: {}]
  %s18 = inlined_call_operand.vmem [shape: f32[1,64], index: 18, kind: input, shape index: {}]
  %s19 = inlined_call_operand.hbm [shape: f32[8,128], index: 19, kind: output, shape index: {}]
  %s20 = sld [smem:[#allocation0]]
  $region122: #{tpu_custom_call.1} parent=0
    _
  %s22 = ssub.s32 1, %s20
  %s23 = scalar_select 0, %s22, %s20
  %v24 = vstv %s11
  %25 = vst [vmem:[#allocation2] sm:$0x1] %v24
  %v26 = vstv %s13
  %27 = vst [vmem:[#allocation3] sm:$0x1] %v26
  $region1: #{tpu_custom_call.1} parent=0
    #allocation4 [shape = 'u8[4096]{0}', space=vmem, size = 0x1000, scoped, tag = 'input window, operand 0, single buffered']
    #allocation5 [shape = 's32[1]{0}', space=sflag, size = 0x4, scoped, tag = 'scoped memory for tpu_custom_call.1']
    #allocation6 [shape = 's32[1]{0}', space=sflag, size = 0x4, scoped, tag = 'scoped memory for tpu_custom_call.1']
    #allocation7 [shape = 'u8[4096]{0}', space=vmem, size = 0x1000, scoped, tag = 'input window, operand 1, single buffered']
    #allocation8 [shape = 's32[1]{0}', space=sflag, size = 0x4, scoped, tag = 'scoped memory for tpu_custom_call.1']
    #allocation9 [shape = 'u8[16384]{0}', space=vmem, size = 0x4000, scoped, tag = 'input window, operand 3, single buffered']
    #allocation10 [shape = 'u8[8192]{0}', space=vmem, size = 0x2000, scoped, tag = 'input window, operand 4, single buffered']
    #allocation11 [shape = 's32[1]{0}', space=sflag, size = 0x4, scoped, tag = 'scoped memory for tpu_custom_call.1']
    #allocation12 [shape = 'u8[512]{0}', space=vmem, size = 0x400, scoped, tag = 'input window, operand 9, single buffered']
    #allocation13 [shape = 'u8[512]{0}', space=vmem, size = 0x400, scoped, tag = 'input window, operand 10, single buffered']
    #allocation14 [shape = 's32[1]{0}', space=sflag, size = 0x4, scoped, tag = 'scoped memory for tpu_custom_call.1']
    #allocation15 [shape = 'u8[512]{0}', space=vmem, size = 0x400, scoped, tag = 'input window, operand 12, single buffered']
    #allocation16 [shape = 'u8[512]{0}', space=vmem, size = 0x400, scoped, tag = 'input window, operand 14, single buffered']
    #allocation17 [shape = 's32[1]{0}', space=sflag, size = 0x4, scoped, tag = 'scoped memory for tpu_custom_call.1']
    #allocation18 [shape = 'u8[16384]{0}', space=vmem, size = 0x4000, scoped, tag = 'input window, operand 17, single buffered']
    #allocation19 [shape = 'u8[4096]{0}', space=vmem, size = 0x1000, scoped, tag = 'output window, operand 0, single buffered']
    %28 = vsyncpa [#allocation5], 0
    %29 = vsyncpa [#allocation8], 0
    %30 = vsyncpa [#allocation11], 0
    %31 = vsyncpa [#allocation14], 0
    %32 = vsyncpa [#allocation17], 0
    %33 = vsyncpa [#allocation6], 0
    // Predicated region
    $region2: #{tpu_custom_call.1} parent=1 // pred_check
      _
    $region3: #{tpu_custom_call.1} parent=1 // pred_check_branch
      %35 = sbr.rel (0) target = $region5
    $region4: #{tpu_custom_call.1} parent=1 // pred_region
      %s37 = ssub.s32 128, 128
      %38 = vsyncadd [#allocation5], %s37
      %s40 = sshll.u32 [#allocation4], 4
      %s41 = int_to_ptr.vmem [resolvable:$true] %s40
      %43 = dma.hbm_to_vmem [thread:$0]  %s0, 128, %s41, [#allocation5]
    $region5: #{tpu_custom_call.1} parent=1 // pred_fallthru
      _
    // Predicated region
    $region6: #{tpu_custom_call.1} parent=1 // pred_check
      _
    $region7: #{tpu_custom_call.1} parent=1 // pred_check_branch
      %45 = sbr.rel (0) target = $region9
    $region8: #{tpu_custom_call.1} parent=1 // pred_region
      %s47 = ssub.s32 128, 128
      %48 = vsyncadd [#allocation8], %s47
      %s50 = sshll.u32 [#allocation7], 4
      %s51 = int_to_ptr.vmem [resolvable:$true] %s50
      %53 = dma.hbm_to_vmem [thread:$0]  %s1, 128, %s51, [#allocation8]
    $region9: #{tpu_custom_call.1} parent=1 // pred_fallthru
      _
    // Predicated region
    $region10: #{tpu_custom_call.1} parent=1 // pred_check
      _
    $region11: #{tpu_custom_call.1} parent=1 // pred_check_branch
      %55 = sbr.rel (0) target = $region13
    $region12: #{tpu_custom_call.1} parent=1 // pred_region
      _
    $region13: #{tpu_custom_call.1} parent=1 // pred_fallthru
      _
    // Predicated region
    $region14: #{tpu_custom_call.1} parent=1 // pred_check
      _
    $region15: #{tpu_custom_call.1} parent=1 // pred_check_branch
      %57 = sbr.rel (0) target = $region17
    $region16: #{tpu_custom_call.1} parent=1 // pred_region
      %s59 = ssub.s32 512, 512
      %60 = vsyncadd [#allocation8], %s59
      %s61 = sshll.u32 [#allocation9], 4
      %s62 = int_to_ptr.vmem [resolvable:$true] %s61
      %67 = dma.hbm_to_vmem [thread:$0]  %s3, 512, %s62, [#allocation8], 128, 128, 8
    $region17: #{tpu_custom_call.1} parent=1 // pred_fallthru
      _
    // Predicated region
    $region18: #{tpu_custom_call.1} parent=1 // pred_check
      _
    $region19: #{tpu_custom_call.1} parent=1 // pred_check_branch
      %69 = sbr.rel (0) target = $region21
    $region20: #{tpu_custom_call.1} parent=1 // pred_region
      %s71 = ssub.s32 256, 256
      %72 = vsyncadd [#allocation11], %s71
      %s73 = sshll.u32 [#allocation10], 4
      %s74 = int_to_ptr.vmem [resolvable:$true] %s73
      %79 = dma.hbm_to_vmem [thread:$0]  %s4, 256, %s74, [#allocation11], 128, 128, 8
    $region21: #{tpu_custom_call.1} parent=1 // pred_fallthru
      _
    // Predicated region
    $region22: #{tpu_custom_call.1} parent=1 // pred_check
      _
    $region23: #{tpu_custom_call.1} parent=1 // pred_check_branch
      %81 = sbr.rel (0) target = $region25
    $region24: #{tpu_custom_call.1} parent=1 // pred_region
      _
    $region25: #{tpu_custom_call.1} parent=1 // pred_fallthru
      _
    // Predicated region
    $region26: #{tpu_custom_call.1} parent=1 // pred_check
      _
    $region27: #{tpu_custom_call.1} parent=1 // pred_check_branch
      %83 = sbr.rel (0) target = $region29
    $region28: #{tpu_custom_call.1} parent=1 // pred_region
      _
    $region29: #{tpu_custom_call.1} parent=1 // pred_fallthru
      _
    // Predicated region
    $region30: #{tpu_custom_call.1} parent=1 // pred_check
      _
    $region31: #{tpu_custom_call.1} parent=1 // pred_check_branch
      %85 = sbr.rel (0) target = $region33
    $region32: #{tpu_custom_call.1} parent=1 // pred_region
      _
    $region33: #{tpu_custom_call.1} parent=1 // pred_fallthru
      _
    // Predicated region
    $region34: #{tpu_custom_call.1} parent=1 // pred_check
      _
    $region35: #{tpu_custom_call.1} parent=1 // pred_check_branch
      %87 = sbr.rel (0) target = $region37
    $region36: #{tpu_custom_call.1} parent=1 // pred_region
      _
    $region37: #{tpu_custom_call.1} parent=1 // pred_fallthru
      _
    // Predicated region
    $region38: #{tpu_custom_call.1} parent=1 // pred_check
      _
    $region39: #{tpu_custom_call.1} parent=1 // pred_check_branch
      %89 = sbr.rel (0) target = $region41
    $region40: #{tpu_custom_call.1} parent=1 // pred_region
      %s91 = ssub.s32 16, 16
      %92 = vsyncadd [#allocation11], %s91
      %s94 = sshll.u32 [#allocation12], 4
      %s95 = int_to_ptr.vmem [resolvable:$true] %s94
      %97 = dma.hbm_to_vmem [thread:$0]  %s9, 16, %s95, [#allocation11]
    $region41: #{tpu_custom_call.1} parent=1 // pred_fallthru
      _
    // Predicated region
    $region42: #{tpu_custom_call.1} parent=1 // pred_check
      _
    $region43: #{tpu_custom_call.1} parent=1 // pred_check_branch
      %99 = sbr.rel (0) target = $region45
    $region44: #{tpu_custom_call.1} parent=1 // pred_region
      %s101 = ssub.s32 16, 16
      %102 = vsyncadd [#allocation14], %s101
      %s104 = sshll.u32 [#allocation13], 4
      %s105 = int_to_ptr.vmem [resolvable:$true] %s104
      %107 = dma.hbm_to_vmem [thread:$0]  %s10, 16, %s105, [#allocation14]
    $region45: #{tpu_custom_call.1} parent=1 // pred_fallthru
      _
    // Predicated region
    $region46: #{tpu_custom_call.1} parent=1 // pred_check
      _
    $region47: #{tpu_custom_call.1} parent=1 // pred_check_branch
      %109 = sbr.rel (0) target = $region49
    $region48: #{tpu_custom_call.1} parent=1 // pred_region
      _
    $region49: #{tpu_custom_call.1} parent=1 // pred_fallthru
      _
    // Predicated region
    $region50: #{tpu_custom_call.1} parent=1 // pred_check
      _
    $region51: #{tpu_custom_call.1} parent=1 // pred_check_branch
      %111 = sbr.rel (0) target = $region53
    $region52: #{tpu_custom_call.1} parent=1 // pred_region
      %s113 = ssub.s32 16, 16
      %114 = vsyncadd [#allocation14], %s113
      %s116 = sshll.u32 [#allocation15], 4
      %s117 = int_to_ptr.vmem [resolvable:$true] %s116
      %119 = dma.hbm_to_vmem [thread:$0]  %s12, 16, %s117, [#allocation14]
    $region53: #{tpu_custom_call.1} parent=1 // pred_fallthru
      _
    // Predicated region
    $region54: #{tpu_custom_call.1} parent=1 // pred_check
      _
    $region55: #{tpu_custom_call.1} parent=1 // pred_check_branch
      %121 = sbr.rel (0) target = $region57
    $region56: #{tpu_custom_call.1} parent=1 // pred_region
      _
    $region57: #{tpu_custom_call.1} parent=1 // pred_fallthru
      _
    // Predicated region
    $region58: #{tpu_custom_call.1} parent=1 // pred_check
      _
    $region59: #{tpu_custom_call.1} parent=1 // pred_check_branch
      %123 = sbr.rel (0) target = $region61
    $region60: #{tpu_custom_call.1} parent=1 // pred_region
      %s125 = ssub.s32 16, 16
      %126 = vsyncadd [#allocation17], %s125
      %s128 = sshll.u32 [#allocation16], 4
      %s129 = int_to_ptr.vmem [resolvable:$true] %s128
      %131 = dma.hbm_to_vmem [thread:$0]  %s14, 16, %s129, [#allocation17]
    $region61: #{tpu_custom_call.1} parent=1 // pred_fallthru
      _
    // Predicated region
    $region62: #{tpu_custom_call.1} parent=1 // pred_check
      _
    $region63: #{tpu_custom_call.1} parent=1 // pred_check_branch
      %133 = sbr.rel (0) target = $region65
    $region64: #{tpu_custom_call.1} parent=1 // pred_region
      _
    $region65: #{tpu_custom_call.1} parent=1 // pred_fallthru
      _
    // Predicated region
    $region66: #{tpu_custom_call.1} parent=1 // pred_check
      _
    $region67: #{tpu_custom_call.1} parent=1 // pred_check_branch
      %135 = sbr.rel (0) target = $region69
    $region68: #{tpu_custom_call.1} parent=1 // pred_region
      _
    $region69: #{tpu_custom_call.1} parent=1 // pred_fallthru
      _
    // Predicated region
    $region70: #{tpu_custom_call.1} parent=1 // pred_check
      _
    $region71: #{tpu_custom_call.1} parent=1 // pred_check_branch
      %137 = sbr.rel (0) target = $region73
    $region72: #{tpu_custom_call.1} parent=1 // pred_region
      %s139 = ssub.s32 512, 512
      %140 = vsyncadd [#allocation17], %s139
      %s141 = sshll.u32 [#allocation18], 4
      %s142 = int_to_ptr.vmem [resolvable:$true] %s141
      %147 = dma.hbm_to_vmem [thread:$0]  %s17, 512, %s142, [#allocation17], 128, 128, 8
    $region73: #{tpu_custom_call.1} parent=1 // pred_fallthru
      _
    // Predicated region
    $region74: #{tpu_custom_call.1} parent=1 // pred_check
      _
    $region75: #{tpu_custom_call.1} parent=1 // pred_check_branch
      %149 = sbr.rel (0) target = $region77
    $region76: #{tpu_custom_call.1} parent=1 // pred_region
      _
    $region77: #{tpu_custom_call.1} parent=1 // pred_fallthru
      _
    // Predicated region
    $region78: #{tpu_custom_call.1} parent=1 // pred_check
      _
    $region79: #{tpu_custom_call.1} parent=1 // pred_check_branch
      %151 = sbr.rel (0) target = $region81
    $region80: #{tpu_custom_call.1} parent=1 // pred_region
      %152 = dma.done [#allocation5], 128
    $region81: #{tpu_custom_call.1} parent=1 // pred_fallthru
      _
    // Predicated region
    $region82: #{tpu_custom_call.1} parent=1 // pred_check
      _
    $region83: #{tpu_custom_call.1} parent=1 // pred_check_branch
      %154 = sbr.rel (0) target = $region85
    $region84: #{tpu_custom_call.1} parent=1 // pred_region
      %155 = dma.done [#allocation8], 128
    $region85: #{tpu_custom_call.1} parent=1 // pred_fallthru
      _
    // Predicated region
    $region86: #{tpu_custom_call.1} parent=1 // pred_check
      _
    $region87: #{tpu_custom_call.1} parent=1 // pred_check_branch
      %157 = sbr.rel (0) target = $region89
    $region88: #{tpu_custom_call.1} parent=1 // pred_region
      %158 = dma.done [#allocation8], 512
    $region89: #{tpu_custom_call.1} parent=1 // pred_fallthru
      _
    // Predicated region
    $region90: #{tpu_custom_call.1} parent=1 // pred_check
      _
    $region91: #{tpu_custom_call.1} parent=1 // pred_check_branch
      %160 = sbr.rel (0) target = $region93
    $region92: #{tpu_custom_call.1} parent=1 // pred_region
      %161 = dma.done [#allocation11], 256
    $region93: #{tpu_custom_call.1} parent=1 // pred_fallthru
      _
    // Predicated region
    $region94: #{tpu_custom_call.1} parent=1 // pred_check
      _
    $region95: #{tpu_custom_call.1} parent=1 // pred_check_branch
      %163 = sbr.rel (0) target = $region97
    $region96: #{tpu_custom_call.1} parent=1 // pred_region
      %164 = dma.done [#allocation11], 16
    $region97: #{tpu_custom_call.1} parent=1 // pred_fallthru
      _
    // Predicated region
    $region98: #{tpu_custom_call.1} parent=1 // pred_check
      _
    $region99: #{tpu_custom_call.1} parent=1 // pred_check_branch
      %166 = sbr.rel (0) target = $region101
    $region100: #{tpu_custom_call.1} parent=1 // pred_region
      %167 = dma.done [#allocation14], 16
    $region101: #{tpu_custom_call.1} parent=1 // pred_fallthru
      _
    // Predicated region
    $region102: #{tpu_custom_call.1} parent=1 // pred_check
      _
    $region103: #{tpu_custom_call.1} parent=1 // pred_check_branch
      %169 = sbr.rel (0) target = $region105
    $region104: #{tpu_custom_call.1} parent=1 // pred_region
      %170 = dma.done [#allocation14], 16
    $region105: #{tpu_custom_call.1} parent=1 // pred_fallthru
      _
    // Predicated region
    $region106: #{tpu_custom_call.1} parent=1 // pred_check
      _
    $region107: #{tpu_custom_call.1} parent=1 // pred_check_branch
      %172 = sbr.rel (0) target = $region109
    $region108: #{tpu_custom_call.1} parent=1 // pred_region
      %173 = dma.done [#allocation17], 16
    $region109: #{tpu_custom_call.1} parent=1 // pred_fallthru
      _
    // Predicated region
    $region110: #{tpu_custom_call.1} parent=1 // pred_check
      _
    $region111: #{tpu_custom_call.1} parent=1 // pred_check_branch
      %175 = sbr.rel (0) target = $region113
    $region112: #{tpu_custom_call.1} parent=1 // pred_region
      %176 = dma.done [#allocation17], 512
    $region113: #{tpu_custom_call.1} parent=1 // pred_fallthru
      _
    %v177 = vld [vmem:[#allocation4] sm:$0xff]
    %v178 = vld [vmem:[#allocation7] sm:$0xff]
    %v179 = vld [vmem:[#allocation9] sm:$0xff]
    %v180 = vld [vmem:[#allocation9 + $0x8] sm:$0xff]
    %v181 = vld [vmem:[#allocation9 + $0x10] sm:$0xff]
    %v182 = vld [vmem:[#allocation9 + $0x18] sm:$0xff]
    %v183 = vld [vmem:[#allocation10] sm:$0xff]
    %v184 = vld [vmem:[#allocation10 + $0x8] sm:$0xff]
    %vm185 = vcmask 130048
    %v187 = vsel %vm185, %v178, 0
    %189 = vmatprep.subr.mxu0 0.0
    %190 = vmatpush1.msra.mxu0 %v183
    %191 = vmatprep.subr.mxu0 0.0
    %192 = vmatpush1.msra.mxu0 %v184
    %193 = vmatprep.subr.mxu0 0.0
    %194 = vmatpush1.msra.mxu0 0.0
    %195 = vmatprep.subr.mxu0 0.0
    %196 = vmatpush1.msra.mxu0 0.0
    %197 = vmatprep.subr.mxu0 0.0
    %198 = vmatpush1.msra.mxu0 0.0
    %199 = vmatprep.subr.mxu0 0.0
    %200 = vmatpush1.msra.mxu0 0.0
    %201 = vmatprep.subr.mxu0 0.0
    %202 = vmatpush1.msra.mxu0 0.0
    %203 = vmatprep.subr.mxu0 0.0
    %204 = vmatpush1.msra.mxu0 0.0
    %205 = vmatprep.subr.mxu0 0.0
    %206 = vmatpush1.msra.mxu0 0.0
    %207 = vmatprep.subr.mxu0 0.0
    %208 = vmatpush1.msra.mxu0 0.0
    %209 = vmatprep.subr.mxu0 0.0
    %210 = vmatpush1.msra.mxu0 0.0
    %211 = vmatprep.subr.mxu0 0.0
    %212 = vmatpush1.msra.mxu0 0.0
    %213 = vmatprep.subr.mxu0 0.0
    %214 = vmatpush1.msra.mxu0 0.0
    %215 = vmatprep.subr.mxu0 0.0
    %216 = vmatpush1.msra.mxu0 0.0
    %217 = vmatprep.subr.mxu0 0.0
    %218 = vmatpush1.msra.mxu0 0.0
    %219 = vmatprep.subr.mxu0 0.0
    %220 = vmatpush1.msra.mxu0 0.0
    %221 = vmatprep.subr.mxu0 0.0
    %222 = vmatpush1.msra.mxu0 0.0
    %223 = vmatprep.subr.mxu0 0.0
    %224 = vmatpush1.msra.mxu0 0.0
    %225 = vmatprep.subr.mxu0 0.0
    %226 = vmatpush1.msra.mxu0 0.0
    %227 = vmatprep.subr.mxu0 0.0
    %228 = vmatpush1.msra.mxu0 0.0
    %229 = vmatprep.subr.mxu0 0.0
    %230 = vmatpush1.msra.mxu0 0.0
    %231 = vmatprep.subr.mxu0 0.0
    %232 = vmatpush1.msra.mxu0 0.0
    %233 = vmatprep.subr.mxu0 0.0
    %234 = vmatpush1.msra.mxu0 0.0
    %235 = vmatprep.subr.mxu0 0.0
    %236 = vmatpush1.msra.mxu0 0.0
    %237 = vmatprep.subr.mxu0 0.0
    %238 = vmatpush1.msra.mxu0 0.0
    %239 = vmatprep.subr.mxu0 0.0
    %240 = vmatpush1.msra.mxu0 0.0
    %241 = vmatprep.subr.mxu0 0.0
    %242 = vmatpush1.msra.mxu0 0.0
    %243 = vmatprep.subr.mxu0 0.0
    %244 = vmatpush1.msra.mxu0 0.0
    %245 = vmatprep.subr.mxu0 0.0
    %246 = vmatpush1.msra.mxu0 0.0
    %247 = vmatprep.subr.mxu0 0.0
    %248 = vmatpush1.msra.mxu0 0.0
    %249 = vmatprep.subr.mxu0 0.0
    %250 = vmatpush1.msra.mxu0 0.0
    %251 = vmatprep.subr.mxu0 0.0
    %252 = vmatpush1.msra.mxu0 0.0
    %253 = vmatprep.mubr.f32.mxu0 0.0
    %254 = vmatmul.mubr.f32.gmra.mrb[0].mxu0 %v187
    %v255 = vpop.f32.mrb[0].mxu0
    %v256 = vadd.f32 0.0, %v255
    %v257 = vpop.f32.mrb[0].mxu0
    %258 = vdwg.mxu0
    %vm259 = vcmask 261120
    %v261 = vsel %vm259, %v177, 0
    %263 = vmatprep.subr.mxu0 0.0
    %264 = vmatpush1.msra.mxu0 %v179
    %265 = vmatprep.subr.mxu0 0.0
    %266 = vmatpush1.msra.mxu0 %v180
    %267 = vmatprep.subr.mxu0 0.0
    %268 = vmatpush1.msra.mxu0 %v181
    %269 = vmatprep.subr.mxu0 0.0
    %270 = vmatpush1.msra.mxu0 %v182
    %271 = vmatprep.subr.mxu0 0.0
    %272 = vmatpush1.msra.mxu0 0.0
    %273 = vmatprep.subr.mxu0 0.0
    %274 = vmatpush1.msra.mxu0 0.0
    %275 = vmatprep.subr.mxu0 0.0
    %276 = vmatpush1.msra.mxu0 0.0
    %277 = vmatprep.subr.mxu0 0.0
    %278 = vmatpush1.msra.mxu0 0.0
    %279 = vmatprep.subr.mxu0 0.0
    %280 = vmatpush1.msra.mxu0 0.0
    %281 = vmatprep.subr.mxu0 0.0
    %282 = vmatpush1.msra.mxu0 0.0
    %283 = vmatprep.subr.mxu0 0.0
    %284 = vmatpush1.msra.mxu0 0.0
    %285 = vmatprep.subr.mxu0 0.0
    %286 = vmatpush1.msra.mxu0 0.0
    %287 = vmatprep.subr.mxu0 0.0
    %288 = vmatpush1.msra.mxu0 0.0
    %289 = vmatprep.subr.mxu0 0.0
    %290 = vmatpush1.msra.mxu0 0.0
    %291 = vmatprep.subr.mxu0 0.0
    %292 = vmatpush1.msra.mxu0 0.0
    %293 = vmatprep.subr.mxu0 0.0
    %294 = vmatpush1.msra.mxu0 0.0
    %295 = vmatprep.subr.mxu0 0.0
    %296 = vmatpush1.msra.mxu0 0.0
    %297 = vmatprep.subr.mxu0 0.0
    %298 = vmatpush1.msra.mxu0 0.0
    %299 = vmatprep.subr.mxu0 0.0
    %300 = vmatpush1.msra.mxu0 0.0
    %301 = vmatprep.subr.mxu0 0.0
    %302 = vmatpush1.msra.mxu0 0.0
    %303 = vmatprep.subr.mxu0 0.0
    %304 = vmatpush1.msra.mxu0 0.0
    %305 = vmatprep.subr.mxu0 0.0
    %306 = vmatpush1.msra.mxu0 0.0
    %307 = vmatprep.subr.mxu0 0.0
    %308 = vmatpush1.msra.mxu0 0.0
    %309 = vmatprep.subr.mxu0 0.0
    %310 = vmatpush1.msra.mxu0 0.0
    %311 = vmatprep.subr.mxu0 0.0
    %312 = vmatpush1.msra.mxu0 0.0
    %313 = vmatprep.subr.mxu0 0.0
    %314 = vmatpush1.msra.mxu0 0.0
    %315 = vmatprep.subr.mxu0 0.0
    %316 = vmatpush1.msra.mxu0 0.0
    %317 = vmatprep.subr.mxu0 0.0
    %318 = vmatpush1.msra.mxu0 0.0
    %319 = vmatprep.subr.mxu0 0.0
    %320 = vmatpush1.msra.mxu0 0.0
    %321 = vmatprep.subr.mxu0 0.0
    %322 = vmatpush1.msra.mxu0 0.0
    %323 = vmatprep.subr.mxu0 0.0
    %324 = vmatpush1.msra.mxu0 0.0
    %325 = vmatprep.subr.mxu0 0.0
    %326 = vmatpush1.msra.mxu0 0.0
    %327 = vmatprep.mubr.f32.mxu0 0.0
    %328 = vmatmul.mubr.f32.gmra.mrb[0].mxu0 %v261
    %v329 = vpop.f32.mrb[0].mxu0
    %v330 = vadd.f32 %v256, %v329
    %v331 = vpop.f32.mrb[0].mxu0
    %332 = vdwg.mxu0
    %v333 = vld [vmem:[%s5] sm:$0x1]
    %v335 = vlaneseq
    %v336 = vshrl.u32 %v335, 7
    %v337 = vsub.s32 0, %v336
    %v338 = vrot.slane %v333, %v337
    %v340 = vadd.f32 %v330, %v338
    %v341 = vmax.f32 %v340, 0.0
    %v342 = vld [vmem:[%s6] sm:$0xff]
    %v343 = vld [vmem:[%s6 + $0x8] sm:$0xff]
    %v344 = vld [vmem:[%s6 + $0x10] sm:$0xff]
    %v345 = vld [vmem:[%s6 + $0x18] sm:$0xff]
    %v346 = vld [vmem:[%s6 + $0x20] sm:$0xff]
    %v347 = vld [vmem:[%s6 + $0x28] sm:$0xff]
    %v348 = vld [vmem:[%s6 + $0x30] sm:$0xff]
    %v349 = vld [vmem:[%s6 + $0x38] sm:$0xff]
    %v350 = vld [vmem:[%s7] sm:$0x1]
    %v352 = vlaneseq
    %v353 = vshrl.u32 %v352, 7
    %v354 = vsub.s32 0, %v353
    %v355 = vrot.slane %v350, %v354
    %vm357 = vcmask 523264
    %v359 = vsel %vm357, %v341, 0
    %361 = vmatprep.subr.mxu0 0.0
    %362 = vmatpush1.msra.mxu0 %v342
    %363 = vmatprep.subr.mxu0 0.0
    %364 = vmatpush1.msra.mxu0 %v343
    %365 = vmatprep.subr.mxu0 0.0
    %366 = vmatpush1.msra.mxu0 %v344
    %367 = vmatprep.subr.mxu0 0.0
    %368 = vmatpush1.msra.mxu0 %v345
    %369 = vmatprep.subr.mxu0 0.0
    %370 = vmatpush1.msra.mxu0 %v346
    %371 = vmatprep.subr.mxu0 0.0
    %372 = vmatpush1.msra.mxu0 %v347
    %373 = vmatprep.subr.mxu0 0.0
    %374 = vmatpush1.msra.mxu0 %v348
    %375 = vmatprep.subr.mxu0 0.0
    %376 = vmatpush1.msra.mxu0 %v349
    %377 = vmatprep.subr.mxu0 0.0
    %378 = vmatpush1.msra.mxu0 0.0
    %379 = vmatprep.subr.mxu0 0.0
    %380 = vmatpush1.msra.mxu0 0.0
    %381 = vmatprep.subr.mxu0 0.0
    %382 = vmatpush1.msra.mxu0 0.0
    %383 = vmatprep.subr.mxu0 0.0
    %384 = vmatpush1.msra.mxu0 0.0
    %385 = vmatprep.subr.mxu0 0.0
    %386 = vmatpush1.msra.mxu0 0.0
    %387 = vmatprep.subr.mxu0 0.0
    %388 = vmatpush1.msra.mxu0 0.0
    %389 = vmatprep.subr.mxu0 0.0
    %390 = vmatpush1.msra.mxu0 0.0
    %391 = vmatprep.subr.mxu0 0.0
    %392 = vmatpush1.msra.mxu0 0.0
    %393 = vmatprep.subr.mxu0 0.0
    %394 = vmatpush1.msra.mxu0 0.0
    %395 = vmatprep.subr.mxu0 0.0
    %396 = vmatpush1.msra.mxu0 0.0
    %397 = vmatprep.subr.mxu0 0.0
    %398 = vmatpush1.msra.mxu0 0.0
    %399 = vmatprep.subr.mxu0 0.0
    %400 = vmatpush1.msra.mxu0 0.0
    %401 = vmatprep.subr.mxu0 0.0
    %402 = vmatpush1.msra.mxu0 0.0
    %403 = vmatprep.subr.mxu0 0.0
    %404 = vmatpush1.msra.mxu0 0.0
    %405 = vmatprep.subr.mxu0 0.0
    %406 = vmatpush1.msra.mxu0 0.0
    %407 = vmatprep.subr.mxu0 0.0
    %408 = vmatpush1.msra.mxu0 0.0
    %409 = vmatprep.subr.mxu0 0.0
    %410 = vmatpush1.msra.mxu0 0.0
    %411 = vmatprep.subr.mxu0 0.0
    %412 = vmatpush1.msra.mxu0 0.0
    %413 = vmatprep.subr.mxu0 0.0
    %414 = vmatpush1.msra.mxu0 0.0
    %415 = vmatprep.subr.mxu0 0.0
    %416 = vmatpush1.msra.mxu0 0.0
    %417 = vmatprep.subr.mxu0 0.0
    %418 = vmatpush1.msra.mxu0 0.0
    %419 = vmatprep.subr.mxu0 0.0
    %420 = vmatpush1.msra.mxu0 0.0
    %421 = vmatprep.subr.mxu0 0.0
    %422 = vmatpush1.msra.mxu0 0.0
    %423 = vmatprep.subr.mxu0 0.0
    %424 = vmatpush1.msra.mxu0 0.0
    %425 = vmatprep.mubr.f32.mxu0 0.0
    %426 = vmatmul.mubr.f32.gmra.mrb[0].mxu0 %v359
    %v427 = vpop.f32.mrb[0].mxu0
    %v428 = vadd.f32 %v355, %v427
    %v429 = vpop.f32.mrb[0].mxu0
    %430 = vdwg.mxu0
    %v431 = vmax.f32 %v428, 0.0
    %v432 = vld [vmem:[%s8] sm:$0xff]
    %v433 = vld [vmem:[%s8 + $0x8] sm:$0xff]
    %v434 = vld [vmem:[%s8 + $0x10] sm:$0xff]
    %v435 = vld [vmem:[%s8 + $0x18] sm:$0xff]
    %v436 = vld [vmem:[%s8 + $0x20] sm:$0xff]
    %v437 = vld [vmem:[%s8 + $0x28] sm:$0xff]
    %v438 = vld [vmem:[%s8 + $0x30] sm:$0xff]
    %v439 = vld [vmem:[%s8 + $0x38] sm:$0xff]
    %v440 = vld [vmem:[#allocation12] sm:$0x1]
    %v442 = vlaneseq
    %v443 = vshrl.u32 %v442, 7
    %v444 = vsub.s32 0, %v443
    %v445 = vrot.slane %v440, %v444
    %v448 = vsel %vm357, %v431, 0
    %450 = vmatprep.subr.mxu0 0.0
    %451 = vmatpush1.msra.mxu0 %v432
    %452 = vmatprep.subr.mxu0 0.0
    %453 = vmatpush1.msra.mxu0 %v433
    %454 = vmatprep.subr.mxu0 0.0
    %455 = vmatpush1.msra.mxu0 %v434
    %456 = vmatprep.subr.mxu0 0.0
    %457 = vmatpush1.msra.mxu0 %v435
    %458 = vmatprep.subr.mxu0 0.0
    %459 = vmatpush1.msra.mxu0 %v436
    %460 = vmatprep.subr.mxu0 0.0
    %461 = vmatpush1.msra.mxu0 %v437
    %462 = vmatprep.subr.mxu0 0.0
    %463 = vmatpush1.msra.mxu0 %v438
    %464 = vmatprep.subr.mxu0 0.0
    %465 = vmatpush1.msra.mxu0 %v439
    %466 = vmatprep.subr.mxu0 0.0
    %467 = vmatpush1.msra.mxu0 0.0
    %468 = vmatprep.subr.mxu0 0.0
    %469 = vmatpush1.msra.mxu0 0.0
    %470 = vmatprep.subr.mxu0 0.0
    %471 = vmatpush1.msra.mxu0 0.0
    %472 = vmatprep.subr.mxu0 0.0
    %473 = vmatpush1.msra.mxu0 0.0
    %474 = vmatprep.subr.mxu0 0.0
    %475 = vmatpush1.msra.mxu0 0.0
    %476 = vmatprep.subr.mxu0 0.0
    %477 = vmatpush1.msra.mxu0 0.0
    %478 = vmatprep.subr.mxu0 0.0
    %479 = vmatpush1.msra.mxu0 0.0
    %480 = vmatprep.subr.mxu0 0.0
    %481 = vmatpush1.msra.mxu0 0.0
    %482 = vmatprep.subr.mxu0 0.0
    %483 = vmatpush1.msra.mxu0 0.0
    %484 = vmatprep.subr.mxu0 0.0
    %485 = vmatpush1.msra.mxu0 0.0
    %486 = vmatprep.subr.mxu0 0.0
    %487 = vmatpush1.msra.mxu0 0.0
    %488 = vmatprep.subr.mxu0 0.0
    %489 = vmatpush1.msra.mxu0 0.0
    %490 = vmatprep.subr.mxu0 0.0
    %491 = vmatpush1.msra.mxu0 0.0
    %492 = vmatprep.subr.mxu0 0.0
    %493 = vmatpush1.msra.mxu0 0.0
    %494 = vmatprep.subr.mxu0 0.0
    %495 = vmatpush1.msra.mxu0 0.0
    %496 = vmatprep.subr.mxu0 0.0
    %497 = vmatpush1.msra.mxu0 0.0
    %498 = vmatprep.subr.mxu0 0.0
    %499 = vmatpush1.msra.mxu0 0.0
    %500 = vmatprep.subr.mxu0 0.0
    %501 = vmatpush1.msra.mxu0 0.0
    %502 = vmatprep.subr.mxu0 0.0
    %503 = vmatpush1.msra.mxu0 0.0
    %504 = vmatprep.subr.mxu0 0.0
    %505 = vmatpush1.msra.mxu0 0.0
    %506 = vmatprep.subr.mxu0 0.0
    %507 = vmatpush1.msra.mxu0 0.0
    %508 = vmatprep.subr.mxu0 0.0
    %509 = vmatpush1.msra.mxu0 0.0
    %510 = vmatprep.subr.mxu0 0.0
    %511 = vmatpush1.msra.mxu0 0.0
    %512 = vmatprep.subr.mxu0 0.0
    %513 = vmatpush1.msra.mxu0 0.0
    %514 = vmatprep.mubr.f32.mxu0 0.0
    %515 = vmatmul.mubr.f32.gmra.mrb[0].mxu0 %v448
    %v516 = vpop.f32.mrb[0].mxu0
    %v517 = vadd.f32 %v445, %v516
    %v518 = vpop.f32.mrb[0].mxu0
    %519 = vdwg.mxu0
    %v520 = vld [vmem:[%s2] sm:$0xff]
    %v521 = vld [vmem:[#allocation13] sm:$0x1]
    %v523 = vlaneseq
    %v524 = vshrl.u32 %v523, 7
    %v525 = vsub.s32 0, %v524
    %v526 = vrot.slane %v521, %v525
    %v528 = vmul.f32 %v517, %v526
    %v529 = vsel %vm357, %v528, 0.0
    %530 = vadd.xlane.f32.xlu0 %v529
    %v531 = vpop.xlane.xlu0 %530
    %v532 = vld [vmem:[#allocation2] sm:$0x1]
    %v534 = vlaneseq
    %v535 = vshrl.u32 %v534, 7
    %v536 = vsub.s32 0, %v535
    %v537 = vrot.slane %v532, %v536
    %v539 = vadd.f32 %v531, %v537
    %v540 = vld [vmem:[#allocation15] sm:$0x1]
    %v542 = vlaneseq
    %v543 = vshrl.u32 %v542, 7
    %v544 = vsub.s32 0, %v543
    %v545 = vrot.slane %v540, %v544
    %v547 = vmul.f32 %v517, %v545
    %v548 = vsel %vm357, %v547, 0.0
    %549 = vadd.xlane.f32.xlu0 %v548
    %v550 = vpop.xlane.xlu0 %549
    %v551 = vld [vmem:[#allocation3] sm:$0x1]
    %v553 = vlaneseq
    %v554 = vshrl.u32 %v553, 7
    %v555 = vsub.s32 0, %v554
    %v556 = vrot.slane %v551, %v555
    %v558 = vadd.f32 %v550, %v556
    %vm559 = vcmp.lt.f32.partialorder %v520, 0.5
    %v560 = vsel %vm559, -1e+09, %v539
    %562 = vrot.lane.b32.xlu0 %v558, 1
    %v563 = vpop.permute.xlu0 %562
    %v565 = vsel %vm559, -1e+09, %v563
    %567 = vrot.lane.b32.xlu0 %v560, 1
    %v568 = vpop.permute.xlu0 %567
    %v570 = vsub.f32 %v565, %v568
    %v571 = vmul.f32 %v570, 1.442695
    %v572 = vpow.pop %v571
    %v573 = vadd.f32 %v572, 1.0
    %v574 = vrcp.pop %v573
    %v575 = vmul.f32 1.0, %v574
    %v576 = vsub.f32 1.0, %v575
    %v577 = vld [vmem:[#allocation16] sm:$0x1]
    %579 = vset.pattern.permute.xlu0 1
    %580 = vperm.xlu0 %579, %v575
    %v581 = vpop.permute.xlu0 %580
    %v584 = vlaneseq
    %v585 = vshrl.u32 %v584, 7
    %v586 = vsub.s32 0, %v585
    %v587 = vrot.slane %v577, %v586
    %v589 = vmul.f32 %v581, %v587
    %v590 = vsub.f32 1.0, %v577
    %592 = vset.pattern.permute.xlu0 1
    %593 = vperm.xlu0 %592, %v576
    %v594 = vpop.permute.xlu0 %593
    %v597 = vlaneseq
    %v598 = vshrl.u32 %v597, 7
    %v599 = vsub.s32 0, %v598
    %v600 = vrot.slane %v590, %v599
    %v602 = vmul.f32 %v594, %v600
    %v603 = vadd.f32 %v589, %v602
    %v604 = vmul.f32 %v517, %v603
    %v605 = vld [vmem:[%s15] sm:$0xff]
    %v606 = vld [vmem:[%s15 + $0x8] sm:$0xff]
    %v607 = vld [vmem:[%s15 + $0x10] sm:$0xff]
    %v608 = vld [vmem:[%s15 + $0x18] sm:$0xff]
    %v609 = vld [vmem:[%s15 + $0x20] sm:$0xff]
    %v610 = vld [vmem:[%s15 + $0x28] sm:$0xff]
    %v611 = vld [vmem:[%s15 + $0x30] sm:$0xff]
    %v612 = vld [vmem:[%s15 + $0x38] sm:$0xff]
    %v613 = vld [vmem:[%s16] sm:$0x1]
    %v615 = vlaneseq
    %v616 = vshrl.u32 %v615, 7
    %v617 = vsub.s32 0, %v616
    %v618 = vrot.slane %v613, %v617
    %v621 = vsel %vm357, %v604, 0
    %623 = vmatprep.subr.mxu0 0.0
    %624 = vmatpush1.msra.mxu0 %v605
    %625 = vmatprep.subr.mxu0 0.0
    %626 = vmatpush1.msra.mxu0 %v606
    %627 = vmatprep.subr.mxu0 0.0
    %628 = vmatpush1.msra.mxu0 %v607
    %629 = vmatprep.subr.mxu0 0.0
    %630 = vmatpush1.msra.mxu0 %v608
    %631 = vmatprep.subr.mxu0 0.0
    %632 = vmatpush1.msra.mxu0 %v609
    %633 = vmatprep.subr.mxu0 0.0
    %634 = vmatpush1.msra.mxu0 %v610
    %635 = vmatprep.subr.mxu0 0.0
    %636 = vmatpush1.msra.mxu0 %v611
    %637 = vmatprep.subr.mxu0 0.0
    %638 = vmatpush1.msra.mxu0 %v612
    %639 = vmatprep.subr.mxu0 0.0
    %640 = vmatpush1.msra.mxu0 0.0
    %641 = vmatprep.subr.mxu0 0.0
    %642 = vmatpush1.msra.mxu0 0.0
    %643 = vmatprep.subr.mxu0 0.0
    %644 = vmatpush1.msra.mxu0 0.0
    %645 = vmatprep.subr.mxu0 0.0
    %646 = vmatpush1.msra.mxu0 0.0
    %647 = vmatprep.subr.mxu0 0.0
    %648 = vmatpush1.msra.mxu0 0.0
    %649 = vmatprep.subr.mxu0 0.0
    %650 = vmatpush1.msra.mxu0 0.0
    %651 = vmatprep.subr.mxu0 0.0
    %652 = vmatpush1.msra.mxu0 0.0
    %653 = vmatprep.subr.mxu0 0.0
    %654 = vmatpush1.msra.mxu0 0.0
    %655 = vmatprep.subr.mxu0 0.0
    %656 = vmatpush1.msra.mxu0 0.0
    %657 = vmatprep.subr.mxu0 0.0
    %658 = vmatpush1.msra.mxu0 0.0
    %659 = vmatprep.subr.mxu0 0.0
    %660 = vmatpush1.msra.mxu0 0.0
    %661 = vmatprep.subr.mxu0 0.0
    %662 = vmatpush1.msra.mxu0 0.0
    %663 = vmatprep.subr.mxu0 0.0
    %664 = vmatpush1.msra.mxu0 0.0
    %665 = vmatprep.subr.mxu0 0.0
    %666 = vmatpush1.msra.mxu0 0.0
    %667 = vmatprep.subr.mxu0 0.0
    %668 = vmatpush1.msra.mxu0 0.0
    %669 = vmatprep.subr.mxu0 0.0
    %670 = vmatpush1.msra.mxu0 0.0
    %671 = vmatprep.subr.mxu0 0.0
    %672 = vmatpush1.msra.mxu0 0.0
    %673 = vmatprep.subr.mxu0 0.0
    %674 = vmatpush1.msra.mxu0 0.0
    %675 = vmatprep.subr.mxu0 0.0
    %676 = vmatpush1.msra.mxu0 0.0
    %677 = vmatprep.subr.mxu0 0.0
    %678 = vmatpush1.msra.mxu0 0.0
    %679 = vmatprep.subr.mxu0 0.0
    %680 = vmatpush1.msra.mxu0 0.0
    %681 = vmatprep.subr.mxu0 0.0
    %682 = vmatpush1.msra.mxu0 0.0
    %683 = vmatprep.subr.mxu0 0.0
    %684 = vmatpush1.msra.mxu0 0.0
    %685 = vmatprep.subr.mxu0 0.0
    %686 = vmatpush1.msra.mxu0 0.0
    %687 = vmatprep.mubr.f32.mxu0 0.0
    %688 = vmatmul.mubr.f32.gmra.mrb[0].mxu0 %v621
    %v689 = vpop.f32.mrb[0].mxu0
    %v690 = vadd.f32 %v618, %v689
    %v691 = vpop.f32.mrb[0].mxu0
    %692 = vdwg.mxu0
    %v693 = vmax.f32 %v690, 0.0
    %v694 = vld [vmem:[#allocation18] sm:$0xff]
    %v695 = vld [vmem:[#allocation18 + $0x8] sm:$0xff]
    %v696 = vld [vmem:[#allocation18 + $0x10] sm:$0xff]
    %v697 = vld [vmem:[#allocation18 + $0x18] sm:$0xff]
    %v698 = vld [vmem:[%s18] sm:$0x1]
    %v700 = vlaneseq
    %v701 = vshrl.u32 %v700, 7
    %v702 = vsub.s32 0, %v701
    %v703 = vrot.slane %v698, %v702
    %v706 = vsel %vm259, %v693, 0
    %708 = vmatprep.subr.mxu0 0.0
    %709 = vmatpush1.msra.mxu0 %v694
    %710 = vmatprep.subr.mxu0 0.0
    %711 = vmatpush1.msra.mxu0 %v695
    %712 = vmatprep.subr.mxu0 0.0
    %713 = vmatpush1.msra.mxu0 %v696
    %714 = vmatprep.subr.mxu0 0.0
    %715 = vmatpush1.msra.mxu0 %v697
    %716 = vmatprep.subr.mxu0 0.0
    %717 = vmatpush1.msra.mxu0 0.0
    %718 = vmatprep.subr.mxu0 0.0
    %719 = vmatpush1.msra.mxu0 0.0
    %720 = vmatprep.subr.mxu0 0.0
    %721 = vmatpush1.msra.mxu0 0.0
    %722 = vmatprep.subr.mxu0 0.0
    %723 = vmatpush1.msra.mxu0 0.0
    %724 = vmatprep.subr.mxu0 0.0
    %725 = vmatpush1.msra.mxu0 0.0
    %726 = vmatprep.subr.mxu0 0.0
    %727 = vmatpush1.msra.mxu0 0.0
    %728 = vmatprep.subr.mxu0 0.0
    %729 = vmatpush1.msra.mxu0 0.0
    %730 = vmatprep.subr.mxu0 0.0
    %731 = vmatpush1.msra.mxu0 0.0
    %732 = vmatprep.subr.mxu0 0.0
    %733 = vmatpush1.msra.mxu0 0.0
    %734 = vmatprep.subr.mxu0 0.0
    %735 = vmatpush1.msra.mxu0 0.0
    %736 = vmatprep.subr.mxu0 0.0
    %737 = vmatpush1.msra.mxu0 0.0
    %738 = vmatprep.subr.mxu0 0.0
    %739 = vmatpush1.msra.mxu0 0.0
    %740 = vmatprep.subr.mxu0 0.0
    %741 = vmatpush1.msra.mxu0 0.0
    %742 = vmatprep.subr.mxu0 0.0
    %743 = vmatpush1.msra.mxu0 0.0
    %744 = vmatprep.subr.mxu0 0.0
    %745 = vmatpush1.msra.mxu0 0.0
    %746 = vmatprep.subr.mxu0 0.0
    %747 = vmatpush1.msra.mxu0 0.0
    %748 = vmatprep.subr.mxu0 0.0
    %749 = vmatpush1.msra.mxu0 0.0
    %750 = vmatprep.subr.mxu0 0.0
    %751 = vmatpush1.msra.mxu0 0.0
    %752 = vmatprep.subr.mxu0 0.0
    %753 = vmatpush1.msra.mxu0 0.0
    %754 = vmatprep.subr.mxu0 0.0
    %755 = vmatpush1.msra.mxu0 0.0
    %756 = vmatprep.subr.mxu0 0.0
    %757 = vmatpush1.msra.mxu0 0.0
    %758 = vmatprep.subr.mxu0 0.0
    %759 = vmatpush1.msra.mxu0 0.0
    %760 = vmatprep.subr.mxu0 0.0
    %761 = vmatpush1.msra.mxu0 0.0
    %762 = vmatprep.subr.mxu0 0.0
    %763 = vmatpush1.msra.mxu0 0.0
    %764 = vmatprep.subr.mxu0 0.0
    %765 = vmatpush1.msra.mxu0 0.0
    %766 = vmatprep.subr.mxu0 0.0
    %767 = vmatpush1.msra.mxu0 0.0
    %768 = vmatprep.subr.mxu0 0.0
    %769 = vmatpush1.msra.mxu0 0.0
    %770 = vmatprep.subr.mxu0 0.0
    %771 = vmatpush1.msra.mxu0 0.0
    %772 = vmatprep.mubr.f32.mxu0 0.0
    %773 = vmatmul.mubr.f32.gmra.mrb[0].mxu0 %v706
    %v774 = vpop.f32.mrb[0].mxu0
    %v775 = vadd.f32 %v703, %v774
    %v776 = vpop.f32.mrb[0].mxu0
    %777 = vdwg.mxu0
    %779 = vrot.lane.b32.xlu0 %v775, 64
    %v780 = vpop.permute.xlu0 %779
    %v782 = vsel %vm357, %v517, %v780
    %783 = vst [vmem:[#allocation19] sm:$0xff] %v782
    // Predicated region
    $region114: #{tpu_custom_call.1} parent=1 // pred_check
      _
    $region115: #{tpu_custom_call.1} parent=1 // pred_check_branch
      %785 = sbr.rel (0) target = $region117
    $region116: #{tpu_custom_call.1} parent=1 // pred_region
      %s787 = ssub.s32 128, 128
      %788 = vsyncadd [#allocation6], %s787
      %s790 = sshll.u32 [#allocation19], 4
      %s791 = int_to_ptr.vmem [resolvable:$true] %s790
      %793 = dma.vmem_to_hbm [thread:$0]  %s791, 128, %s19, [#allocation6]
    $region117: #{tpu_custom_call.1} parent=1 // pred_fallthru
      _
    // Predicated region
    $region118: #{tpu_custom_call.1} parent=1 // pred_check
      _
    $region119: #{tpu_custom_call.1} parent=1 // pred_check_branch
      %795 = sbr.rel (0) target = $region121
    $region120: #{tpu_custom_call.1} parent=1 // pred_region
      %796 = dma.done [#allocation6], 128
    $region121: #{tpu_custom_call.1} parent=1 // pred_fallthru
      _
    %797 = vsyncpa [#allocation5], 1
    %798 = vsyncpa [#allocation8], 1
    %799 = vsyncpa [#allocation11], 1
    %800 = vsyncpa [#allocation14], 1
    %801 = vsyncpa [#allocation17], 1
    %802 = vsyncpa [#allocation6], 1

</llo_original>
